<compile_context>
chip_gen: v5e
topology: v5e:2x2
jax: 0.10.0
libtpu: 0.0.40
codegen_flags: <defaults>
</compile_context>

<pallas_src>
import jax
import jax.numpy as jnp
from jax import lax
from jax.experimental import pallas as pl
from jax.experimental.pallas import tpu as pltpu

_LANE = 128


def _resblock_kernel(w1_ref, b1_ref, w2_ref, b2_ref, x_ref, out_ref):
    """out = relu(W2 @ relu(W1 @ x + b1) + b2 + x) on a (C*H, lane_tile) block."""
    x = x_ref[...].astype(jnp.float32)
    f = jnp.dot(w1_ref[...], x, preferred_element_type=jnp.float32) + b1_ref[...]
    f = jnp.maximum(f, 0.0)
    f = jnp.dot(w2_ref[...], f, preferred_element_type=jnp.float32) + b2_ref[...]
    out_ref[...] = jnp.maximum(f + x, 0.0).astype(out_ref.dtype)


def _band_conv_matrix(w, C, H):
    """(Cout,Cin,3,1) OIHW weights -> (C*H, C*H) banded matrix so that
    W_band @ x_flat reproduces Conv2d(kernel=(3,1), padding=(1,0)).
    Zero padding along H is exact: the band simply runs off the diagonal."""
    w = w[:, :, :, 0].astype(jnp.float32)  # (Cout, Cin, 3)
    wb = jnp.zeros((C * H, C * H), jnp.float32)
    for t, k in ((0, -1), (1, 0), (2, 1)):  # tap t reads input row ho + (t - 1)
        shift = jnp.eye(H, k=k, dtype=jnp.float32)  # shift[ho, hi]=1 iff hi=ho+k
        wb = wb + jnp.kron(w[:, :, t], shift)
    return wb


def _vmem_limit_bytes():
    cap = None
    try:
        info = pltpu.get_tpu_info()
        cap = getattr(info, "vmem_capacity_bytes", None)
    except Exception:
        cap = None
    if not cap:
        cap = 64 * 1024 * 1024  # conservative default (v7x-sized VMEM)
    return int(cap * 0.85)      # ~15% headroom for Mosaic internal scratch


def _pick_lane_tile(CH, L, x_itemsize, tile_budget_bytes):
    """Choose lane-tile width lb and padded lane extent L_pad."""
    # Bytes per lane column that scale with lb per grid step:
    #   2-deep double buffers for input + output block (native dtype) plus
    #   ~4 f32 in-kernel temporaries (x_f32, conv1, conv2, pre-cast result).
    per_lane = CH * (4 * x_itemsize + 4 * 4)
    max_lb = max(_LANE, (tile_budget_bytes // per_lane) // _LANE * _LANE)

    if L <= _LANE:
        return L, L  # tiny problem: one (possibly sub-128-lane) full block
    L_up = pl.cdiv(L, _LANE) * _LANE
    if L_up <= max_lb and L_up * per_lane < 8 * 1024 * 1024:
        # Single lane-dense block: forcing a split on 1-TC parts (v5e/v6e) is
        # pure per-step overhead, and sub-8MiB blocks aren't worth it on v7x.
        return L_up, L_up
    # Big problem: split (>=2 grid steps, both v7x TCs busy) within the budget.
    half = pl.cdiv(pl.cdiv(L_up, 2), _LANE) * _LANE
    lb = min(max_lb, half)
    L_pad = pl.cdiv(L, lb) * lb
    return lb, L_pad


def res_block_identity(x_nchw, w1, b1, w2, b2):
    """x_nchw: (N, C, H, W); w*: (Cout, Cin, 3, 1) (PyTorch OIHW); b*: (Cout,)."""
    N, C, H, W = x_nchw.shape
    Cout, Cin, KH, KW = w1.shape
    assert (KH, KW) == (3, 1)
    assert Cin == C and Cout == C, "identity residual requires in_ch == out_ch"
    CH = C * H
    # Banded-MXU path: W_band is (C*H)^2 f32, fine for the small channel counts
    # / heights this module targets.
    # TODO(synk): for C*H > ~1024 switch to a K-tiled (or small-C VPU) variant.
    assert CH <= 1024, "banded-MXU path expects small C*H"

    # Lane-dense folding: (N,C,H,W) -> (C,H,N,W) -> (C*H, N*W).
    L = N * W
    x_flat = jnp.transpose(x_nchw, (1, 2, 0, 3)).reshape(CH, L)

    # Banded conv matrices + per-row biases (resident in VMEM, constant index).
    wb1 = _band_conv_matrix(w1, C, H)
    wb2 = _band_conv_matrix(w2, C, H)
    bb1 = jnp.repeat(b1.astype(jnp.float32), H).reshape(CH, 1)
    bb2 = jnp.repeat(b2.astype(jnp.float32), H).reshape(CH, 1)

    vmem_limit = _vmem_limit_bytes()
    fixed_bytes = 2 * (2 * CH * CH * 4 + 2 * CH * 4)  # weights+biases, 2-deep
    tile_budget = max(1 << 20, vmem_limit - fixed_bytes)
    lb, L_pad = _pick_lane_tile(CH, L, x_flat.dtype.itemsize, tile_budget)
    if L_pad != L:
        x_flat = jnp.pad(x_flat, ((0, 0), (0, L_pad - L)))
    grid = (L_pad // lb,)

    const_mat = pl.BlockSpec((CH, CH), lambda i: (0, 0))
    const_vec = pl.BlockSpec((CH, 1), lambda i: (0, 0))
    act_spec = pl.BlockSpec((CH, lb), lambda i: (0, i))

    out_flat = pl.pallas_call(
        _resblock_kernel,
        out_shape=jax.ShapeDtypeStruct((CH, L_pad), x_nchw.dtype),
        grid=grid,
        in_specs=[const_mat, const_vec, const_mat, const_vec, act_spec],
        out_specs=act_spec,
        compiler_params=pltpu.CompilerParams(
            dimension_semantics=("parallel",),
            vmem_limit_bytes=vmem_limit,
        ),
    )(wb1, bb1, wb2, bb2, x_flat)

    # Unfold back to NCHW.
    out = out_flat[:, :L].reshape(C, H, N, W).transpose(2, 0, 1, 3)
    return out


def _reference(x, w1, b1, w2, b2):
    dn = ("NCHW", "OIHW", "NCHW")
    pad = [(1, 1), (0, 0)]
    f = lax.conv_general_dilated(x, w1, (1, 1), pad, dimension_numbers=dn)
    f = jnp.maximum(f + b1.reshape(1, -1, 1, 1), 0.0)
    f = lax.conv_general_dilated(f, w2, (1, 1), pad, dimension_numbers=dn)
    f = f + b2.reshape(1, -1, 1, 1)
    return jnp.maximum(f + x, 0.0)


if __name__ == "__main__":
    N, C, H, W = 2, 4, 16, 16   # in_channels == out_channels == 4
    key = jax.random.PRNGKey(0)
    kx, kw1, kb1, kw2, kb2 = jax.random.split(key, 5)

    x = jax.random.normal(kx, (N, C, H, W), jnp.float32)
    w1 = jax.random.normal(kw1, (C, C, 3, 1), jnp.float32) * 0.2
    b1 = jax.random.normal(kb1, (C,), jnp.float32) * 0.1
    w2 = jax.random.normal(kw2, (C, C, 3, 1), jnp.float32) * 0.2
    b2 = jax.random.normal(kb2, (C,), jnp.float32) * 0.1

    out = jax.block_until_ready(res_block_identity(x, w1, b1, w2, b2))
    ref = jax.block_until_ready(_reference(x, w1, b1, w2, b2))

    assert out.shape == ref.shape == (N, C, H, W)
    assert jnp.max(jnp.abs(out - ref)) < 1e-4, "mismatch vs reference conv"

    print("KERNEL_OK")
</pallas_src>

<mosaic_0001>
module attributes {stable_mosaic.version = 11 : i64} {
  func.func @_resblock_kernel(%arg0: i32, %arg1: memref<64x64xf32, #tpu.memory_space<vmem>>, %arg2: memref<64x1xf32, #tpu.memory_space<vmem>>, %arg3: memref<64x64xf32, #tpu.memory_space<vmem>>, %arg4: memref<64x1xf32, #tpu.memory_space<vmem>>, %arg5: memref<64x32xf32, #tpu.memory_space<vmem>>, %arg6: memref<64x32xf32, #tpu.memory_space<vmem>>) attributes {dimension_semantics = [#tpu.dimension_semantics<parallel>], iteration_bounds = array<i64: 1>, scalar_prefetch = 0 : i64, scratch_operands = 0 : i64, tpu.core_type = #tpu.core_type<tc>, window_params = [{pipeline_mode = #tpu.pipeline_mode<synchronous>, transform_indices = @transform_0, window_bounds = array<i64: 64, 64>}, {pipeline_mode = #tpu.pipeline_mode<synchronous>, transform_indices = @transform_1, window_bounds = array<i64: 64, 1>}, {pipeline_mode = #tpu.pipeline_mode<synchronous>, transform_indices = @transform_2, window_bounds = array<i64: 64, 64>}, {pipeline_mode = #tpu.pipeline_mode<synchronous>, transform_indices = @transform_3, window_bounds = array<i64: 64, 1>}, {transform_indices = @transform_4, window_bounds = array<i64: 64, 32>}, {transform_indices = @transform_5, window_bounds = array<i64: 64, 32>}]} {
    %c0 = arith.constant 0 : index
    %c0_0 = arith.constant 0 : index
    %0 = vector.load %arg5[%c0, %c0_0] : memref<64x32xf32, #tpu.memory_space<vmem>>, vector<64x32xf32>
    %c0_1 = arith.constant 0 : index
    %c0_2 = arith.constant 0 : index
    %1 = vector.load %arg1[%c0_1, %c0_2] : memref<64x64xf32, #tpu.memory_space<vmem>>, vector<64x64xf32>
    %cst = arith.constant dense<0.000000e+00> : vector<64x32xf32>
    %2 = tpu.matmul %1, %0, %cst {dimension_numbers = #tpu.dot_dimension_numbers<[1], [0], [0], [1], [0, 0, 1, 1], [], []>} : vector<64x64xf32>, vector<64x32xf32>, vector<64x32xf32> -> vector<64x32xf32>
    %c0_3 = arith.constant 0 : index
    %c0_4 = arith.constant 0 : index
    %3 = vector.load %arg2[%c0_3, %c0_4] : memref<64x1xf32, #tpu.memory_space<vmem>>, vector<64x1xf32>
    %4 = vector.broadcast %3 : vector<64x1xf32> to vector<64x32xf32>
    %5 = arith.addf %2, %4 : vector<64x32xf32>
    %cst_5 = arith.constant 0.000000e+00 : f32
    %6 = vector.broadcast %cst_5 : f32 to vector<64x32xf32>
    %7 = arith.maximumf %5, %6 : vector<64x32xf32>
    %c0_6 = arith.constant 0 : index
    %c0_7 = arith.constant 0 : index
    %8 = vector.load %arg3[%c0_6, %c0_7] : memref<64x64xf32, #tpu.memory_space<vmem>>, vector<64x64xf32>
    %cst_8 = arith.constant dense<0.000000e+00> : vector<64x32xf32>
    %9 = tpu.matmul %8, %7, %cst_8 {dimension_numbers = #tpu.dot_dimension_numbers<[1], [0], [0], [1], [0, 0, 1, 1], [], []>} : vector<64x64xf32>, vector<64x32xf32>, vector<64x32xf32> -> vector<64x32xf32>
    %c0_9 = arith.constant 0 : index
    %c0_10 = arith.constant 0 : index
    %10 = vector.load %arg4[%c0_9, %c0_10] : memref<64x1xf32, #tpu.memory_space<vmem>>, vector<64x1xf32>
    %11 = vector.broadcast %10 : vector<64x1xf32> to vector<64x32xf32>
    %12 = arith.addf %9, %11 : vector<64x32xf32>
    %13 = arith.addf %12, %0 : vector<64x32xf32>
    %cst_11 = arith.constant 0.000000e+00 : f32
    %14 = vector.broadcast %cst_11 : f32 to vector<64x32xf32>
    %15 = arith.maximumf %13, %14 : vector<64x32xf32>
    %c0_12 = arith.constant 0 : index
    %c0_13 = arith.constant 0 : index
    %16 = vector.load %arg6[%c0_12, %c0_13] : memref<64x32xf32, #tpu.memory_space<vmem>>, vector<64x32xf32>
    tpu.vector_store %arg6[%c0_12, %c0_13], %15 {strides = array<i32>} : memref<64x32xf32, #tpu.memory_space<vmem>>, vector<64x32xf32>,
    return
  }
  func.func @transform_0(%arg0: i32) -> (i32, i32) {
    %c0_i32 = arith.constant 0 : i32
    %c0_i32_0 = arith.constant 0 : i32
    %c0_i32_1 = arith.constant 0 : i32
    return %c0_i32, %c0_i32_0 : i32, i32
  }
  func.func @transform_1(%arg0: i32) -> (i32, i32) {
    %c0_i32 = arith.constant 0 : i32
    %c0_i32_0 = arith.constant 0 : i32
    %c0_i32_1 = arith.constant 0 : i32
    return %c0_i32, %c0_i32_0 : i32, i32
  }
  func.func @transform_2(%arg0: i32) -> (i32, i32) {
    %c0_i32 = arith.constant 0 : i32
    %c0_i32_0 = arith.constant 0 : i32
    %c0_i32_1 = arith.constant 0 : i32
    return %c0_i32, %c0_i32_0 : i32, i32
  }
  func.func @transform_3(%arg0: i32) -> (i32, i32) {
    %c0_i32 = arith.constant 0 : i32
    %c0_i32_0 = arith.constant 0 : i32
    %c0_i32_1 = arith.constant 0 : i32
    return %c0_i32, %c0_i32_0 : i32, i32
  }
  func.func @transform_4(%arg0: i32) -> (i32, i32) {
    %c0_i32 = arith.constant 0 : i32
    %c0_i32_0 = arith.constant 0 : i32
    return %c0_i32, %arg0 : i32, i32
  }
  func.func @transform_5(%arg0: i32) -> (i32, i32) {
    %c0_i32 = arith.constant 0 : i32
    %c0_i32_0 = arith.constant 0 : i32
    return %c0_i32, %arg0 : i32, i32
  }
}

</mosaic_0001>

<llo_original>
// kernel: tpu_custom_call.1
$region0: #{tpu_custom_call.1}
  #allocation0 [shape = 'u32[]', space=smem, size = 0x4, offset = 0x4, fixed_abs, tag = 'smem constant byte address 0x4 - core index']
  #allocation1 [shape = 'u32[72,128]{1,0:T(1,128)}', space=vmem, size = 0x9000, scoped, tag = 'internal scratch']
  %s0 = inlined_call_operand.vmem [shape: f32[64,64], index: 0, kind: input, shape index: {}]
  %s1 = inlined_call_operand.vmem [shape: f32[64,1], index: 1, kind: input, shape index: {}]
  %s2 = inlined_call_operand.vmem [shape: f32[64,64], index: 2, kind: input, shape index: {}]
  %s3 = inlined_call_operand.vmem [shape: f32[64,1], index: 3, kind: input, shape index: {}]
  %s4 = inlined_call_operand.vmem [shape: f32[64,32], index: 4, kind: input, shape index: {}]
  %s5 = inlined_call_operand.vmem [shape: f32[64,32], index: 5, kind: output, shape index: {}]
  %s6 = sld [smem:[#allocation0]]
  $region30: #{tpu_custom_call.1} parent=0
    _
  %s8 = ssub.s32 1, %s6
  %s9 = scalar_select 0, %s8, %s6
  // Predicated region
  $region2: #{tpu_custom_call.1} parent=0 // pred_check
    _
  $region3: #{tpu_custom_call.1} parent=0 // pred_check_branch
    %11 = sbr.rel (0) target = $region5
  $region4: #{tpu_custom_call.1} parent=0 // pred_region
    _
  $region5: #{tpu_custom_call.1} parent=0 // pred_fallthru
    _
  // Predicated region
  $region6: #{tpu_custom_call.1} parent=0 // pred_check
    _
  $region7: #{tpu_custom_call.1} parent=0 // pred_check_branch
    %13 = sbr.rel (0) target = $region9
  $region8: #{tpu_custom_call.1} parent=0 // pred_region
    _
  $region9: #{tpu_custom_call.1} parent=0 // pred_fallthru
    _
  // Predicated region
  $region10: #{tpu_custom_call.1} parent=0 // pred_check
    _
  $region11: #{tpu_custom_call.1} parent=0 // pred_check_branch
    %15 = sbr.rel (0) target = $region13
  $region12: #{tpu_custom_call.1} parent=0 // pred_region
    _
  $region13: #{tpu_custom_call.1} parent=0 // pred_fallthru
    _
  // Predicated region
  $region14: #{tpu_custom_call.1} parent=0 // pred_check
    _
  $region15: #{tpu_custom_call.1} parent=0 // pred_check_branch
    %17 = sbr.rel (0) target = $region17
  $region16: #{tpu_custom_call.1} parent=0 // pred_region
    _
  $region17: #{tpu_custom_call.1} parent=0 // pred_fallthru
    _
  // Predicated region
  $region18: #{tpu_custom_call.1} parent=0 // pred_check
    _
  $region19: #{tpu_custom_call.1} parent=0 // pred_check_branch
    %19 = sbr.rel (0) target = $region21
  $region20: #{tpu_custom_call.1} parent=0 // pred_region
    _
  $region21: #{tpu_custom_call.1} parent=0 // pred_fallthru
    _
  %v20 = vld [vmem:[%s4] sm:$0xff]
  %v21 = vld [vmem:[%s4 + $0x8] sm:$0xff]
  %v22 = vld [vmem:[%s4 + $0x10] sm:$0xff]
  %v23 = vld [vmem:[%s4 + $0x18] sm:$0xff]
  %v24 = vld [vmem:[%s4 + $0x20] sm:$0xff]
  %v25 = vld [vmem:[%s4 + $0x28] sm:$0xff]
  %v26 = vld [vmem:[%s4 + $0x30] sm:$0xff]
  %v27 = vld [vmem:[%s4 + $0x38] sm:$0xff]
  %v28 = vld [vmem:[%s0] sm:$0xff]
  %v29 = vld [vmem:[%s0 + $0x8] sm:$0xff]
  %v30 = vld [vmem:[%s0 + $0x10] sm:$0xff]
  %v31 = vld [vmem:[%s0 + $0x18] sm:$0xff]
  %v32 = vld [vmem:[%s0 + $0x20] sm:$0xff]
  %v33 = vld [vmem:[%s0 + $0x28] sm:$0xff]
  %v34 = vld [vmem:[%s0 + $0x30] sm:$0xff]
  %v35 = vld [vmem:[%s0 + $0x38] sm:$0xff]
  %v36 = vld [vmem:[%s1] sm:$0xff]
  %v37 = vld [vmem:[%s1 + $0x8] sm:$0xff]
  %v38 = vld [vmem:[%s1 + $0x10] sm:$0xff]
  %v39 = vld [vmem:[%s1 + $0x18] sm:$0xff]
  %v40 = vld [vmem:[%s1 + $0x20] sm:$0xff]
  %v41 = vld [vmem:[%s1 + $0x28] sm:$0xff]
  %v42 = vld [vmem:[%s1 + $0x30] sm:$0xff]
  %v43 = vld [vmem:[%s1 + $0x38] sm:$0xff]
  %45 = vset.pattern.permute.xlu0 0
  %46 = vperm.xlu0 %45, %v36
  %v47 = vpop.permute.xlu0 %46
  %50 = vset.pattern.permute.xlu0 0
  %51 = vperm.xlu0 %50, %v37
  %v52 = vpop.permute.xlu0 %51
  %55 = vset.pattern.permute.xlu0 0
  %56 = vperm.xlu0 %55, %v38
  %v57 = vpop.permute.xlu0 %56
  %60 = vset.pattern.permute.xlu0 0
  %61 = vperm.xlu0 %60, %v39
  %v62 = vpop.permute.xlu0 %61
  %65 = vset.pattern.permute.xlu0 0
  %66 = vperm.xlu0 %65, %v40
  %v67 = vpop.permute.xlu0 %66
  %70 = vset.pattern.permute.xlu0 0
  %71 = vperm.xlu0 %70, %v41
  %v72 = vpop.permute.xlu0 %71
  %75 = vset.pattern.permute.xlu0 0
  %76 = vperm.xlu0 %75, %v42
  %v77 = vpop.permute.xlu0 %76
  %80 = vset.pattern.permute.xlu0 0
  %81 = vperm.xlu0 %80, %v43
  %v82 = vpop.permute.xlu0 %81
  %vm84 = vcmask 523264
  %v86 = vsel %vm84, %v28, 0
  %v89 = vsel %vm84, %v29, 0
  %v92 = vsel %vm84, %v30, 0
  %v95 = vsel %vm84, %v31, 0
  %v98 = vsel %vm84, %v32, 0
  %v101 = vsel %vm84, %v33, 0
  %v104 = vsel %vm84, %v34, 0
  %v107 = vsel %vm84, %v35, 0
  %109 = vmatpush.msra.mxu0 0.0
  %110 = vmatpush.msra.mxu0 0.0
  %111 = vmatpush.msra.mxu0 0.0
  %112 = vmatpush.msra.mxu0 0.0
  %113 = vmatpush.msra.mxu0 0.0
  %114 = vmatpush.msra.mxu0 0.0
  %115 = vmatpush.msra.mxu0 0.0
  %116 = vmatpush.msra.mxu0 0.0
  %117 = vmatpush.msra.mxu0 %v27
  %118 = vmatpush.msra.mxu0 %v26
  %119 = vmatpush.msra.mxu0 %v25
  %120 = vmatpush.msra.mxu0 %v24
  %121 = vmatpush.msra.mxu0 %v23
  %122 = vmatpush.msra.mxu0 %v22
  %123 = vmatpush.msra.mxu0 %v21
  %124 = vmatpush.msra.mxu0 %v20
  %125 = vmatmul.f32.gmra.mxu0 %v86
  %v126 = vpop.f32.mrf.mxu0
  %v127 = vadd.f32 %v47, %v126
  %128 = vmatmul.f32.gmra.mxu0 %v89
  %v129 = vpop.f32.mrf.mxu0
  %v130 = vadd.f32 %v52, %v129
  %131 = vmatmul.f32.gmra.mxu0 %v92
  %v132 = vpop.f32.mrf.mxu0
  %v133 = vadd.f32 %v57, %v132
  %134 = vmatmul.f32.gmra.mxu0 %v95
  %v135 = vpop.f32.mrf.mxu0
  %v136 = vadd.f32 %v62, %v135
  %137 = vmatmul.f32.gmra.mxu0 %v98
  %v138 = vpop.f32.mrf.mxu0
  %v139 = vadd.f32 %v67, %v138
  %140 = vmatmul.f32.gmra.mxu0 %v101
  %v141 = vpop.f32.mrf.mxu0
  %v142 = vadd.f32 %v72, %v141
  %143 = vmatmul.f32.gmra.mxu0 %v104
  %v144 = vpop.f32.mrf.mxu0
  %v145 = vadd.f32 %v77, %v144
  %146 = vmatmul.f32.gmra.mxu0 %v107
  %v147 = vpop.f32.mrf.mxu0
  %v148 = vadd.f32 %v82, %v147
  %149 = vdwg.mxu0
  %v150 = vmax.f32 %v127, 0.0
  %v151 = vmax.f32 %v130, 0.0
  %v152 = vmax.f32 %v133, 0.0
  %v153 = vmax.f32 %v136, 0.0
  %v154 = vmax.f32 %v139, 0.0
  %v155 = vmax.f32 %v142, 0.0
  %v156 = vmax.f32 %v145, 0.0
  %v157 = vmax.f32 %v148, 0.0
  %v158 = vld [vmem:[%s2] sm:$0xff]
  %v159 = vld [vmem:[%s2 + $0x8] sm:$0xff]
  %v160 = vld [vmem:[%s2 + $0x10] sm:$0xff]
  %v161 = vld [vmem:[%s2 + $0x18] sm:$0xff]
  %v162 = vld [vmem:[%s2 + $0x20] sm:$0xff]
  %v163 = vld [vmem:[%s2 + $0x28] sm:$0xff]
  %v164 = vld [vmem:[%s2 + $0x30] sm:$0xff]
  %v165 = vld [vmem:[%s2 + $0x38] sm:$0xff]
  %v166 = vld [vmem:[%s3] sm:$0xff]
  %v167 = vld [vmem:[%s3 + $0x8] sm:$0xff]
  %v168 = vld [vmem:[%s3 + $0x10] sm:$0xff]
  %v169 = vld [vmem:[%s3 + $0x18] sm:$0xff]
  %v170 = vld [vmem:[%s3 + $0x20] sm:$0xff]
  %v171 = vld [vmem:[%s3 + $0x28] sm:$0xff]
  %v172 = vld [vmem:[%s3 + $0x30] sm:$0xff]
  %v173 = vld [vmem:[%s3 + $0x38] sm:$0xff]
  %175 = vset.pattern.permute.xlu0 0
  %176 = vperm.xlu0 %175, %v166
  %v177 = vpop.permute.xlu0 %176
  %180 = vset.pattern.permute.xlu0 0
  %181 = vperm.xlu0 %180, %v167
  %v182 = vpop.permute.xlu0 %181
  %185 = vset.pattern.permute.xlu0 0
  %186 = vperm.xlu0 %185, %v168
  %v187 = vpop.permute.xlu0 %186
  %190 = vset.pattern.permute.xlu0 0
  %191 = vperm.xlu0 %190, %v169
  %v192 = vpop.permute.xlu0 %191
  %195 = vset.pattern.permute.xlu0 0
  %196 = vperm.xlu0 %195, %v170
  %v197 = vpop.permute.xlu0 %196
  %200 = vset.pattern.permute.xlu0 0
  %201 = vperm.xlu0 %200, %v171
  %v202 = vpop.permute.xlu0 %201
  %205 = vset.pattern.permute.xlu0 0
  %206 = vperm.xlu0 %205, %v172
  %v207 = vpop.permute.xlu0 %206
  %210 = vset.pattern.permute.xlu0 0
  %211 = vperm.xlu0 %210, %v173
  %v212 = vpop.permute.xlu0 %211
  %v215 = vsel %vm84, %v158, 0
  %v218 = vsel %vm84, %v159, 0
  %v221 = vsel %vm84, %v160, 0
  %v224 = vsel %vm84, %v161, 0
  %v227 = vsel %vm84, %v162, 0
  %v230 = vsel %vm84, %v163, 0
  %v233 = vsel %vm84, %v164, 0
  %v236 = vsel %vm84, %v165, 0
  %238 = vmatpush.msra.mxu0 0.0
  %239 = vmatpush.msra.mxu0 0.0
  %240 = vmatpush.msra.mxu0 0.0
  %241 = vmatpush.msra.mxu0 0.0
  %242 = vmatpush.msra.mxu0 0.0
  %243 = vmatpush.msra.mxu0 0.0
  %244 = vmatpush.msra.mxu0 0.0
  %245 = vmatpush.msra.mxu0 0.0
  %246 = vmatpush.msra.mxu0 %v157
  %247 = vmatpush.msra.mxu0 %v156
  %248 = vmatpush.msra.mxu0 %v155
  %249 = vmatpush.msra.mxu0 %v154
  %250 = vmatpush.msra.mxu0 %v153
  %251 = vmatpush.msra.mxu0 %v152
  %252 = vmatpush.msra.mxu0 %v151
  %253 = vmatpush.msra.mxu0 %v150
  %254 = vmatmul.f32.gmra.mxu0 %v215
  %v255 = vpop.f32.mrf.mxu0
  %v256 = vadd.f32 %v177, %v255
  %257 = vmatmul.f32.gmra.mxu0 %v218
  %v258 = vpop.f32.mrf.mxu0
  %v259 = vadd.f32 %v182, %v258
  %260 = vmatmul.f32.gmra.mxu0 %v221
  %v261 = vpop.f32.mrf.mxu0
  %v262 = vadd.f32 %v187, %v261
  %263 = vmatmul.f32.gmra.mxu0 %v224
  %v264 = vpop.f32.mrf.mxu0
  %v265 = vadd.f32 %v192, %v264
  %266 = vmatmul.f32.gmra.mxu0 %v227
  %v267 = vpop.f32.mrf.mxu0
  %v268 = vadd.f32 %v197, %v267
  %269 = vmatmul.f32.gmra.mxu0 %v230
  %v270 = vpop.f32.mrf.mxu0
  %v271 = vadd.f32 %v202, %v270
  %272 = vmatmul.f32.gmra.mxu0 %v233
  %v273 = vpop.f32.mrf.mxu0
  %v274 = vadd.f32 %v207, %v273
  %275 = vmatmul.f32.gmra.mxu0 %v236
  %v276 = vpop.f32.mrf.mxu0
  %v277 = vadd.f32 %v212, %v276
  %278 = vdwg.mxu0
  %v279 = vadd.f32 %v256, %v20
  %v280 = vadd.f32 %v259, %v21
  %v281 = vadd.f32 %v262, %v22
  %v282 = vadd.f32 %v265, %v23
  %v283 = vadd.f32 %v268, %v24
  %v284 = vadd.f32 %v271, %v25
  %v285 = vadd.f32 %v274, %v26
  %v286 = vadd.f32 %v277, %v27
  %v287 = vmax.f32 %v279, 0.0
  %v288 = vmax.f32 %v280, 0.0
  %v289 = vmax.f32 %v281, 0.0
  %v290 = vmax.f32 %v282, 0.0
  %v291 = vmax.f32 %v283, 0.0
  %v292 = vmax.f32 %v284, 0.0
  %v293 = vmax.f32 %v285, 0.0
  %v294 = vmax.f32 %v286, 0.0
  %vm295 = vcmask 261120
  %296 = vst.msk [vmem:[%s5] sm:$0xff] %vm295, %v287
  %297 = vst.msk [vmem:[%s5 + $0x8] sm:$0xff] %vm295, %v288
  %298 = vst.msk [vmem:[%s5 + $0x10] sm:$0xff] %vm295, %v289
  %299 = vst.msk [vmem:[%s5 + $0x18] sm:$0xff] %vm295, %v290
  %300 = vst.msk [vmem:[%s5 + $0x20] sm:$0xff] %vm295, %v291
  %301 = vst.msk [vmem:[%s5 + $0x28] sm:$0xff] %vm295, %v292
  %302 = vst.msk [vmem:[%s5 + $0x30] sm:$0xff] %vm295, %v293
  %303 = vst.msk [vmem:[%s5 + $0x38] sm:$0xff] %vm295, %v294
  // Predicated region
  $region22: #{tpu_custom_call.1} parent=0 // pred_check
    _
  $region23: #{tpu_custom_call.1} parent=0 // pred_check_branch
    %305 = sbr.rel (0) target = $region25
  $region24: #{tpu_custom_call.1} parent=0 // pred_region
    _
  $region25: #{tpu_custom_call.1} parent=0 // pred_fallthru
    _
  // Predicated region
  $region26: #{tpu_custom_call.1} parent=0 // pred_check
    _
  $region27: #{tpu_custom_call.1} parent=0 // pred_check_branch
    %307 = sbr.rel (0) target = $region29
  $region28: #{tpu_custom_call.1} parent=0 // pred_region
    _
  $region29: #{tpu_custom_call.1} parent=0 // pred_fallthru
    _

</llo_original>
